<compile_context>
chip_gen: v6e
topology: v6e:2x2x1
jax: 0.10.0
libtpu: 0.0.40
codegen_flags: <defaults>
</compile_context>

<pallas_src>
import numpy as np
import jax
import jax.numpy as jnp
from jax.experimental import pallas as pl
from jax.experimental.pallas import tpu as pltpu


def _round_up(x, m):
    return ((x + m - 1) // m) * m


def _vmem_capacity_bytes():
    try:
        return int(pltpu.get_tpu_info().vmem_capacity_bytes)
    except Exception:
        return 64 << 20  # conservative fallback (v7x per-TensorCore VMEM)


def _footprint_bytes(tm, tk, tn, in_itemsize):
    # double-buffered input tiles + (up to) double-buffered f32 output tile
    return 2 * (tm * tk + tk * tn) * in_itemsize + 2 * tm * tn * 4


def _select_tiles(M, K, N, in_itemsize, budget_bytes):
    """Pick (tm, tk, tn): (8,128)-aligned, grown toward the VMEM budget."""
    tm = min(512, _round_up(M, 8))
    tk = min(1024, _round_up(K, 128))
    tn = min(2048, _round_up(N, 128))   # big tn => adjacency streamed fewer times
    while _footprint_bytes(tm, tk, tn, in_itemsize) > budget_bytes and tn > 128:
        tn = max(128, _round_up(tn // 2, 128))
    while _footprint_bytes(tm, tk, tn, in_itemsize) > budget_bytes and tm > 8:
        tm = max(8, _round_up(tm // 2, 8))
    while _footprint_bytes(tm, tk, tn, in_itemsize) > budget_bytes and tk > 128:
        tk = max(128, _round_up(tk // 2, 128))
    return tm, tk, tn


def _vmem_limit_bytes(footprint):
    cap = _vmem_capacity_bytes()
    return int(min(cap - (4 << 20), max(2 * footprint, 32 << 20)))


# ---------------------------------------------------------------------------
# Kernel: tiled matmul, f32 accumulation directly into the K-resident output tile
# ---------------------------------------------------------------------------
def _make_mm_kernel(k_axis):
    def kernel(adj_ref, h_ref, o_ref):
        k = pl.program_id(k_axis)

        @pl.when(k == 0)
        def _():
            o_ref[...] = jnp.zeros_like(o_ref)

        o_ref[...] += jnp.dot(adj_ref[...], h_ref[...],
                              preferred_element_type=jnp.float32)
    return kernel


def _tiled_matmul_2d(adj_p, h_p, tm, tk, tn):
    """out (Mp, Np) f32 = adj_p (Mp, Kp) @ h_p (Kp, Np)."""
    Mp, Kp = adj_p.shape
    _, Np = h_p.shape
    itemsize = np.dtype(adj_p.dtype).itemsize
    grid = (Mp // tm, Np // tn, Kp // tk)        # reduction axis last
    cost = pl.CostEstimate(
        flops=2 * Mp * Kp * Np,
        transcendentals=0,
        bytes_accessed=(Mp * Kp * (Np // tn) + Kp * Np * (Mp // tm)) * itemsize
                       + Mp * Np * 4,
    )
    return pl.pallas_call(
        _make_mm_kernel(2),
        out_shape=jax.ShapeDtypeStruct((Mp, Np), jnp.float32),
        grid_spec=pltpu.PrefetchScalarGridSpec(
            num_scalar_prefetch=0,
            grid=grid,
            in_specs=[pl.BlockSpec((tm, tk), lambda i, j, k: (i, k)),   # adjacency tile
                      pl.BlockSpec((tk, tn), lambda i, j, k: (k, j))],  # folded H tile
            out_specs=pl.BlockSpec((tm, tn), lambda i, j, k: (i, j)),
        ),
        compiler_params=pltpu.CompilerParams(
            dimension_semantics=("parallel", "parallel", "arbitrary"),
            vmem_limit_bytes=_vmem_limit_bytes(_footprint_bytes(tm, tk, tn, itemsize)),
        ),
        cost_estimate=cost,
    )(adj_p, h_p)


def _tiled_matmul_batched(adj_p, h_p, tm, tk, tn):
    """out (B, Mp, Np) f32 = adj_p (Mp, Kp) @ h_p[b] for each b. No transposes of H."""
    B, Kp, Np = h_p.shape
    Mp, _ = adj_p.shape
    itemsize = np.dtype(adj_p.dtype).itemsize
    grid = (B, Mp // tm, Np // tn, Kp // tk)     # reduction axis last
    cost = pl.CostEstimate(
        flops=2 * B * Mp * Kp * Np,
        transcendentals=0,
        bytes_accessed=(Mp * Kp * B * (Np // tn) + B * Kp * Np * (Mp // tm)) * itemsize
                       + B * Mp * Np * 4,
    )
    return pl.pallas_call(
        _make_mm_kernel(3),
        out_shape=jax.ShapeDtypeStruct((B, Mp, Np), jnp.float32),
        grid_spec=pltpu.PrefetchScalarGridSpec(
            num_scalar_prefetch=0,
            grid=grid,
            in_specs=[pl.BlockSpec((tm, tk), lambda b, i, j, k: (i, k)),
                      pl.BlockSpec((None, tk, tn), lambda b, i, j, k: (b, k, j))],
            out_specs=pl.BlockSpec((None, tm, tn), lambda b, i, j, k: (b, i, j)),
        ),
        compiler_params=pltpu.CompilerParams(
            dimension_semantics=("parallel", "parallel", "parallel", "arbitrary"),
            vmem_limit_bytes=_vmem_limit_bytes(_footprint_bytes(tm, tk, tn, itemsize)),
        ),
        cost_estimate=cost,
    )(adj_p, h_p)


# ---------------------------------------------------------------------------
# Host-side glue: edge list -> dense adjacency (id remapping + duplicate-sum),
# mirroring the PyTorch sparse-COO construction (done once, outside the hot loop).
# ---------------------------------------------------------------------------
def build_adjacency(fixed_edge_weights, n_nodes):
    ew = np.asarray(fixed_edge_weights)
    node1_ids, node2_ids = ew[:, 0], ew[:, 1]
    weights = ew[:, 2].astype(np.float32)

    node_idx = np.unique(np.concatenate([np.unique(node1_ids), np.unique(node2_ids)]))
    node_idx = np.sort(node_idx)
    assert len(node_idx) <= n_nodes, (
        f"edge list references {len(node_idx)} distinct node ids but n_nodes={n_nodes}")
    id_to_idx = {float(v): i for i, v in enumerate(node_idx.tolist())}
    n1 = np.array([id_to_idx[float(n)] for n in node1_ids], dtype=np.int64)
    n2 = np.array([id_to_idx[float(n)] for n in node2_ids], dtype=np.int64)

    adj = np.zeros((n_nodes, n_nodes), dtype=np.float32)
    np.add.at(adj, (n1, n2), weights)   # duplicate edges sum, like sparse COO
    return adj


class NeighborAggregationSimple:
    """Pallas TPU equivalent of Neighbor_Aggregation_Simple (fixed edge weights)."""

    def __init__(self, n_nodes, h_size, f_out_size=None, fixed_edge_weights=None,
                 compute_dtype=jnp.float32):
        # compute_dtype=jnp.bfloat16 is the opt-in fast path (MXU bf16 peak, half the
        # adjacency HBM stream); accumulation is f32 either way. Default f32 keeps the
        # module's numerics exactly.
        self.n_nodes = n_nodes
        self.h_size = h_size
        self.f_out_size = f_out_size
        self.compute_dtype = compute_dtype
        self.adj = None
        self._adj_cast = None
        self._adj_pad_cache = {}
        if fixed_edge_weights is not None:
            self.set_fixed_edge_weights(fixed_edge_weights)

    def set_fixed_edge_weights(self, fixed_edge_weights):
        self.adj = build_adjacency(fixed_edge_weights, self.n_nodes)
        # Hoisted static prep: cast once; padded copies cached per tile config below.
        self._adj_cast = jnp.asarray(self.adj, dtype=self.compute_dtype)
        self._adj_pad_cache = {}

    def _padded_adj(self, tm, tk):
        key = (tm, tk)
        if key not in self._adj_pad_cache:
            M = K = self.n_nodes
            Mp, Kp = _round_up(M, tm), _round_up(K, tk)
            self._adj_pad_cache[key] = jnp.pad(self._adj_cast,
                                               ((0, Mp - M), (0, Kp - K)))
        return self._adj_pad_cache[key]

    def __call__(self, H, edge_weights=None):
        return self.forward(H, edge_weights)

    def forward(self, H, edge_weights=None):
        if edge_weights is not None:
            raise ValueError("Edge weights are constant (provided at init); "
                             "do not provide edge weights at forward pass.")
        if self._adj_cast is None:
            raise ValueError("Edge weights were not provided at initialization.")
        batch, n_nodes, h_size = H.shape
        assert n_nodes == self.n_nodes

        cd = self.compute_dtype
        itemsize = np.dtype(cd).itemsize
        budget = min(_vmem_capacity_bytes() // 2, 40 << 20)   # v7x => ~32 MiB, v5e/v6e => 40 MiB
        M = K = n_nodes

        if h_size % 128 == 0:
            # h_size already lane-dense: batch becomes a leading parallel grid axis,
            # no HBM transposes of H / AG.
            N = h_size
            tm, tk, tn = _select_tiles(M, K, N, itemsize, budget)
            Mp, Kp, Np = _round_up(M, tm), _round_up(K, tk), _round_up(N, tn)
            # v7x has 2 TensorCores: ensure >= 2 parallel grid steps when possible.
            if batch * (Mp // tm) * (Np // tn) == 1 and _round_up(M, 8) >= 16:
                tm = max(8, _round_up(tm // 2, 8))
                Mp = _round_up(M, tm)
            adj_p = self._padded_adj(tm, tk)
            h_p = jnp.pad(H.astype(cd), ((0, 0), (0, Kp - K), (0, Np - N)))
            out = _tiled_matmul_batched(adj_p, h_p, tm, tk, tn)
            return out[:, :M, :N]
        else:
            # Fold batch into the lane (N) dimension so the output stays lane-dense.
            N = batch * h_size
            tm, tk, tn = _select_tiles(M, K, N, itemsize, budget)
            Mp, Kp, Np = _round_up(M, tm), _round_up(K, tk), _round_up(N, tn)
            if (Mp // tm) * (Np // tn) == 1 and _round_up(M, 8) >= 16:
                tm = max(8, _round_up(tm // 2, 8))
                Mp = _round_up(M, tm)
            adj_p = self._padded_adj(tm, tk)
            hf = jnp.transpose(H, (1, 0, 2)).reshape(n_nodes, N).astype(cd)
            hf_p = jnp.pad(hf, ((0, Kp - K), (0, Np - N)))
            out = _tiled_matmul_2d(adj_p, hf_p, tm, tk, tn)
            out = out[:M, :N]
            return jnp.transpose(out.reshape(n_nodes, batch, h_size), (1, 0, 2))


# ---------------------------------------------------------------------------
# Demo / smoke test
# ---------------------------------------------------------------------------
if __name__ == "__main__":
    key = jax.random.PRNGKey(0)
    k_e1, k_e2, k_w, k_h1, k_h2 = jax.random.split(key, 5)

    batch, n_nodes, n_edges = 2, 16, 40

    # deterministic synthetic fixed edge weights: (node1_id, node2_id, weight);
    # node ids offset by 100 to exercise the id -> index remapping
    node1_ids = np.array(jax.random.randint(k_e1, (n_edges,), 0, n_nodes)) + 100
    node2_ids = np.array(jax.random.randint(k_e2, (n_edges,), 0, n_nodes)) + 100
    node1_ids[:n_nodes] = np.arange(n_nodes) + 100
    node2_ids[:n_nodes] = np.arange(n_nodes)[::-1] + 100
    edge_w = np.array(jax.random.uniform(k_w, (n_edges,), dtype=jnp.float32))
    fixed_edge_weights = np.stack(
        [node1_ids.astype(np.float32), node2_ids.astype(np.float32), edge_w], axis=1)

    # ---- path A: h_size < 128 -> batch folded into lanes (f32, exact semantics) ----
    h_size_a = 32
    mod_f32 = NeighborAggregationSimple(n_nodes, h_size_a, h_size_a,
                                        fixed_edge_weights=fixed_edge_weights,
                                        compute_dtype=jnp.float32)
    H_a = jax.random.normal(k_h1, (batch, n_nodes, h_size_a), dtype=jnp.float32)
    AG_a = jax.block_until_ready(mod_f32(H_a))
    adj = jnp.asarray(mod_f32.adj)
    ref_a = jnp.einsum("ij,bjk->bik", adj, H_a)
    np.testing.assert_allclose(np.asarray(AG_a), np.asarray(ref_a), rtol=1e-5, atol=1e-5)

    # ---- path B: h_size % 128 == 0 -> batched grid, no HBM transposes (f32) ----
    h_size_b = 128
    mod_b = NeighborAggregationSimple(n_nodes, h_size_b, h_size_b,
                                      fixed_edge_weights=fixed_edge_weights,
                                      compute_dtype=jnp.float32)
    H_b = jax.random.normal(k_h2, (batch, n_nodes, h_size_b), dtype=jnp.float32)
    AG_b = jax.block_until_ready(mod_b(H_b))
    ref_b = jnp.einsum("ij,bjk->bik", adj, H_b)
    np.testing.assert_allclose(np.asarray(AG_b), np.asarray(ref_b), rtol=1e-5, atol=1e-5)

    # ---- opt-in bf16 compute (f32 accumulation): fast path, loosened tolerance ----
    mod_bf16 = NeighborAggregationSimple(n_nodes, h_size_a, h_size_a,
                                         fixed_edge_weights=fixed_edge_weights,
                                         compute_dtype=jnp.bfloat16)
    AG_bf16 = jax.block_until_ready(mod_bf16(H_a))
    np.testing.assert_allclose(np.asarray(AG_bf16), np.asarray(ref_a), rtol=5e-2, atol=1e-1)

    print("KERNEL_OK")
</pallas_src>

<mosaic_0001>
module attributes {stable_mosaic.version = 11 : i64} {
  func.func @kernel(%arg0: i32, %arg1: i32, %arg2: i32, %arg3: memref<8x128xf32, #tpu.memory_space<vmem>>, %arg4: memref<128x128xf32, #tpu.memory_space<vmem>>, %arg5: memref<8x128xf32, #tpu.memory_space<vmem>>) attributes {dimension_semantics = [#tpu.dimension_semantics<parallel>, #tpu.dimension_semantics<parallel>, #tpu.dimension_semantics<arbitrary>], iteration_bounds = array<i64: 2, 1, 1>, scalar_prefetch = 0 : i64, scratch_operands = 0 : i64, tpu.core_type = #tpu.core_type<tc>, window_params = [{transform_indices = @transform_0, window_bounds = array<i64: 8, 128>}, {transform_indices = @transform_1, window_bounds = array<i64: 128, 128>}, {transform_indices = @transform_2, window_bounds = array<i64: 8, 128>}]} {
    %c0_i32 = arith.constant 0 : i32
    %0 = arith.cmpi eq, %arg2, %c0_i32 : i32
    %1 = arith.extui %0 : i1 to i32
    %c0_i32_0 = arith.constant 0 : i32
    %2 = arith.cmpi ne, %1, %c0_i32_0 : i32
    scf.if %2 {
      %cst_8 = arith.constant 0.000000e+00 : f32
      %9 = vector.broadcast %cst_8 : f32 to vector<8x128xf32>
      %c0_9 = arith.constant 0 : index
      %c0_10 = arith.constant 0 : index
      %10 = vector.load %arg5[%c0_9, %c0_10] : memref<8x128xf32, #tpu.memory_space<vmem>>, vector<8x128xf32>
      tpu.vector_store %arg5[%c0_9, %c0_10], %9 {strides = array<i32>} : memref<8x128xf32, #tpu.memory_space<vmem>>, vector<8x128xf32>,
    } else {
    }
    %c0 = arith.constant 0 : index
    %c0_1 = arith.constant 0 : index
    %3 = vector.load %arg5[%c0, %c0_1] : memref<8x128xf32, #tpu.memory_space<vmem>>, vector<8x128xf32>
    %c0_2 = arith.constant 0 : index
    %c0_3 = arith.constant 0 : index
    %4 = vector.load %arg3[%c0_2, %c0_3] : memref<8x128xf32, #tpu.memory_space<vmem>>, vector<8x128xf32>
    %c0_4 = arith.constant 0 : index
    %c0_5 = arith.constant 0 : index
    %5 = vector.load %arg4[%c0_4, %c0_5] : memref<128x128xf32, #tpu.memory_space<vmem>>, vector<128x128xf32>
    %cst = arith.constant dense<0.000000e+00> : vector<8x128xf32>
    %6 = tpu.matmul %4, %5, %cst {dimension_numbers = #tpu.dot_dimension_numbers<[1], [0], [0], [1], [0, 0, 1, 1], [], []>} : vector<8x128xf32>, vector<128x128xf32>, vector<8x128xf32> -> vector<8x128xf32>
    %7 = arith.addf %3, %6 : vector<8x128xf32>
    %c0_6 = arith.constant 0 : index
    %c0_7 = arith.constant 0 : index
    %8 = vector.load %arg5[%c0_6, %c0_7] : memref<8x128xf32, #tpu.memory_space<vmem>>, vector<8x128xf32>
    tpu.vector_store %arg5[%c0_6, %c0_7], %7 {strides = array<i32>} : memref<8x128xf32, #tpu.memory_space<vmem>>, vector<8x128xf32>,
    return
  }
  func.func @transform_0(%arg0: i32, %arg1: i32, %arg2: i32) -> (i32, i32) {
    %c0_i32 = arith.constant 0 : i32
    return %arg0, %arg2 : i32, i32
  }
  func.func @transform_1(%arg0: i32, %arg1: i32, %arg2: i32) -> (i32, i32) {
    %c0_i32 = arith.constant 0 : i32
    return %arg2, %arg1 : i32, i32
  }
  func.func @transform_2(%arg0: i32, %arg1: i32, %arg2: i32) -> (i32, i32) {
    %c0_i32 = arith.constant 0 : i32
    return %arg0, %arg1 : i32, i32
  }
}

</mosaic_0001>

<llo_original>
// kernel: tpu_custom_call.1
$region0: #{tpu_custom_call.1}
  #allocation0 [shape = 'u32[]', space=smem, size = 0x4, offset = 0x4, fixed_abs, tag = 'smem constant byte address 0x4 - core index']
  #allocation1 [shape = 'u32[144,128]{1,0:T(1,128)}', space=vmem, size = 0x12000, scoped, tag = 'internal scratch']
  %s0 = inlined_call_operand.hbm [shape: f32[16,128], index: 0, kind: input, shape index: {}]
  %s1 = inlined_call_operand.hbm [shape: f32[128,128], index: 1, kind: input, shape index: {}]
  %s2 = inlined_call_operand.hbm [shape: f32[16,128], index: 2, kind: output, shape index: {}]
  %s3 = sld [smem:[#allocation0]]
  $region53: #{tpu_custom_call.1} parent=0
    _
  %s5 = ssub.s32 1, %s3
  %s6 = scalar_select 0, %s5, %s3
  $region1: #{tpu_custom_call.1} parent=0
    #allocation2 [shape = 'u8[8192]{0}', space=vmem, size = 0x2000, scoped, tag = 'input window, operand 0']
    #allocation3 [shape = 's32[2]{0}', space=sflag, size = 0x8, scoped, tag = 'scoped memory for tpu_custom_call.1']
    #allocation4 [shape = 's32[2]{0}', space=sflag, size = 0x8, scoped, tag = 'scoped memory for tpu_custom_call.1']
    #allocation5 [shape = 'u8[65536]{0}', space=vmem, size = 0x10000, scoped, tag = 'input window, operand 1, single buffered']
    #allocation6 [shape = 's32[1]{0}', space=sflag, size = 0x4, scoped, tag = 'scoped memory for tpu_custom_call.1']
    #allocation7 [shape = 'u8[8192]{0}', space=vmem, size = 0x2000, scoped, tag = 'output window, operand 0']
    %7 = vsyncpa [#allocation3], 0
    %s8 = scalar_lea.sflag [#allocation3], 1
    %9 = vsyncpa %s8, 0
    %10 = vsyncpa [#allocation6], 0
    %11 = vsyncpa [#allocation4], 0
    %s12 = scalar_lea.sflag [#allocation4], 1
    %13 = vsyncpa %s12, 0
    loop: start=0, step=1, limit=4
    $region2: #{tpu_custom_call.1} parent=1 // loop_pre_header
      _
    $region3: #{tpu_custom_call.1} parent=1 // loop_header
      %s15 = sphi 0, %s19
      %p16 = scmp.ge.s32.totalorder %s15, 4
      %s22 = sphi 0, %s41
      %s23 = sphi 0, %s37
      %s24 = sphi 0, %s33
      %s25 = sphi 0, %s22
      %s26 = sphi 0, %s23
      %s27 = sphi 0, %s24
      %s28 = sphi 0, %s25
      %s29 = sphi 0, %s26
      %s30 = sphi 0, %s27
      %s46 = sphi 0, %s48
      %s49 = sphi 0, %s46
      %s50 = sphi 0, %s49
      %s66 = sphi 0, %s50
      %s74 = sphi 0, %s76
      %s77 = sphi 0, %s74
      %s78 = sphi 0, %s77
      %s94 = sphi 0, %s78
      %s102 = sphi 0, %s104
      %s105 = sphi 0, %s102
      %s106 = sphi 0, %s105
      %s122 = sphi 0, %s106
    $region4: #{tpu_custom_call.1} parent=1 // loop_header_branch
      %18 = sbr.rel (%p16) target = $region8
    $region5: #{tpu_custom_call.1} parent=1 // loop_body
      %s20 = ssub.s32 %s15, 1
      %s21 = ssub.s32 %s15, 2
      %s31 = sadd.s32 1, %s24
      %p32 = scmp.ge.s32.totalorder %s31, 1
      %s33 = scalar_select %p32, 0, %s31
      %s34 = sadd.s32 1, %s23
      %s35 = scalar_select %p32, %s34, %s23
      %p36 = scmp.ge.s32.totalorder %s35, 1
      %s37 = scalar_select %p36, 0, %s35
      %s38 = sadd.s32 1, %s22
      %s39 = scalar_select %p36, %s38, %s22
      %p40 = scmp.ge.s32.totalorder %s39, 2
      %s41 = scalar_select %p40, 0, %s39
      %s42 = ssub.s32 %s22, %s41
      %s43 = ssub.s32 %s24, %s33
      %s44 = sor.u32 %s42, %s43
      %p45 = scmp.eq.s32.totalorder %s44, 0
      %s47 = sadd.s32 %s46, 1
      %s48 = scalar_select %p45, %s46, %s47
      %p51 = pneg %p45
      %p52 = scmp.eq.s32.totalorder %s15, 1
      %p53 = por %p51, %p52
      %p54 = scmp.ne.s32.totalorder %s46, %s49
      %p55 = scmp.eq.s32.totalorder %s15, 0
      %p56 = por %p54, %p55
      %p57 = scmp.ne.s32.totalorder %s46, %s49
      %p58 = scmp.eq.s32.totalorder %s20, 1
      %p59 = por %p57, %p58
      %p60 = scmp.ne.s32.totalorder %s49, %s50
      %p61 = scmp.eq.s32.totalorder %s20, 0
      %p62 = por %p60, %p61
      %p63 = scmp.ne.s32.totalorder %s49, %s50
      %p64 = scmp.eq.s32.totalorder %s21, 1
      %p65 = por %p63, %p64
      %p67 = scmp.ne.s32.totalorder %s50, %s66
      %p68 = scmp.eq.s32.totalorder %s21, 0
      %p69 = por %p67, %p68
      %s70 = ssub.s32 %s24, %s33
      %s71 = ssub.s32 %s23, %s37
      %s72 = sor.u32 %s70, %s71
      %p73 = scmp.eq.s32.totalorder %s72, 0
      %s75 = sadd.s32 %s74, 1
      %s76 = scalar_select %p73, %s74, %s75
      %p79 = pneg %p73
      %p80 = scmp.eq.s32.totalorder %s15, 1
      %p81 = por %p79, %p80
      %p82 = scmp.ne.s32.totalorder %s74, %s77
      %p83 = scmp.eq.s32.totalorder %s15, 0
      %p84 = por %p82, %p83
      %p85 = scmp.ne.s32.totalorder %s74, %s77
      %p86 = scmp.eq.s32.totalorder %s20, 1
      %p87 = por %p85, %p86
      %p88 = scmp.ne.s32.totalorder %s77, %s78
      %p89 = scmp.eq.s32.totalorder %s20, 0
      %p90 = por %p88, %p89
      %p91 = scmp.ne.s32.totalorder %s77, %s78
      %p92 = scmp.eq.s32.totalorder %s21, 1
      %p93 = por %p91, %p92
      %p95 = scmp.ne.s32.totalorder %s78, %s94
      %p96 = scmp.eq.s32.totalorder %s21, 0
      %p97 = por %p95, %p96
      %s98 = ssub.s32 %s22, %s41
      %s99 = ssub.s32 %s23, %s37
      %s100 = sor.u32 %s98, %s99
      %p101 = scmp.eq.s32.totalorder %s100, 0
      %s103 = sadd.s32 %s102, 1
      %s104 = scalar_select %p101, %s102, %s103
      %p107 = pneg %p101
      %p108 = scmp.eq.s32.totalorder %s15, 1
      %p109 = por %p107, %p108
      %p110 = scmp.ne.s32.totalorder %s102, %s105
      %p111 = scmp.eq.s32.totalorder %s15, 0
      %p112 = por %p110, %p111
      %p113 = scmp.ne.s32.totalorder %s102, %s105
      %p114 = scmp.eq.s32.totalorder %s20, 1
      %p115 = por %p113, %p114
      %p116 = scmp.ne.s32.totalorder %s105, %s106
      %p117 = scmp.eq.s32.totalorder %s20, 0
      %p118 = por %p116, %p117
      %p119 = scmp.ne.s32.totalorder %s105, %s106
      %p120 = scmp.eq.s32.totalorder %s21, 1
      %p121 = por %p119, %p120
      %p123 = scmp.ne.s32.totalorder %s106, %s122
      %p124 = scmp.eq.s32.totalorder %s21, 0
      %p125 = por %p123, %p124
      %p126 = scmp.le.s32.totalorder 1, %s15
      %p127 = scmp.lt.s32.totalorder %s15, 3
      %p128 = pnand %p126, %p127
      %p129 = pneg %p128
      // Predicated region
      $region9: #{tpu_custom_call.1} parent=5 // pred_check
        _
      $region10: #{tpu_custom_call.1} parent=5 // pred_check_branch
        %131 = sbr.rel (%p128) target = $region12
      $region11: #{tpu_custom_call.1} parent=5 // pred_region
        %s132 = ssub.s32 %s15, 1
        // Predicated region
        $region13: #{tpu_custom_call.1} parent=11 // pred_check
          %p133 = pneg %p90
        $region14: #{tpu_custom_call.1} parent=11 // pred_check_branch
          %135 = sbr.rel (%p133) target = $region16
        $region15: #{tpu_custom_call.1} parent=11 // pred_region
          %s136 = smul.u32 16, %s27
          %s138 = ssub.s32 2048, 2048
          %139 = vsyncadd [#allocation6], %s138
          %s140 = sadd.s32 %s26, %s136
          %s141 = smul.addr %s140, 128
          %s142 = scalar_lea.hbm %s1, %s141
          %s143 = sshll.u32 [#allocation5], 4
          %s144 = int_to_ptr.vmem [resolvable:$true] %s143
          %149 = dma.hbm_to_vmem [thread:$0]  %s142, 2048, %s144, [#allocation6], 128, 128, 8
        $region16: #{tpu_custom_call.1} parent=11 // pred_fallthru
          _
      $region12: #{tpu_custom_call.1} parent=5 // pred_fallthru
        _
      %p150 = scmp.lt.s32.totalorder %s15, 2
      // Predicated region
      $region17: #{tpu_custom_call.1} parent=5 // pred_check
        %p151 = pneg %p150
      $region18: #{tpu_custom_call.1} parent=5 // pred_check_branch
        %153 = sbr.rel (%p151) target = $region20
      $region19: #{tpu_custom_call.1} parent=5 // pred_region
        // Predicated region
        $region21: #{tpu_custom_call.1} parent=19 // pred_check
          %p154 = pneg %p56
        $region22: #{tpu_custom_call.1} parent=19 // pred_check_branch
          %156 = sbr.rel (%p154) target = $region24
        $region23: #{tpu_custom_call.1} parent=19 // pred_region
          %s157 = sand.u32 %s46, 1
          %s158 = scalar_lea.sflag [#allocation3], %s157
          %s159 = sand.u32 %s46, 1
          %s160 = smul.addr %s159, 8
          %s161 = scalar_lea.vmem [#allocation2], %s160
          %s163 = ssub.s32 128, 128
          %164 = vsyncadd %s158, %s163
          %s165 = sadd.s32 %s24, %s22
          %s166 = smul.addr %s165, 128
          %s167 = scalar_lea.hbm %s0, %s166
          %s169 = sshll.u32 %s161, 4
          %s170 = int_to_ptr.vmem [resolvable:$true] %s169
          %172 = dma.hbm_to_vmem [thread:$0]  %s167, 128, %s170, %s158
        $region24: #{tpu_custom_call.1} parent=19 // pred_fallthru
          _
      $region20: #{tpu_custom_call.1} parent=5 // pred_fallthru
        _
      %p173 = scmp.le.s32.totalorder 1, %s15
      %p174 = scmp.lt.s32.totalorder %s15, 3
      %p175 = pnand %p173, %p174
      %p176 = pneg %p175
      // Predicated region
      $region25: #{tpu_custom_call.1} parent=5 // pred_check
        _
      $region26: #{tpu_custom_call.1} parent=5 // pred_check_branch
        %178 = sbr.rel (%p175) target = $region28
      $region27: #{tpu_custom_call.1} parent=5 // pred_region
        %s179 = ssub.s32 %s15, 1
        %s180 = sand.u32 %s49, 1
        %s181 = scalar_lea.sflag [#allocation3], %s180
        %s182 = sand.u32 %s49, 1
        %s183 = smul.addr %s182, 8
        %s184 = scalar_lea.vmem [#allocation2], %s183
        // Predicated region
        $region29: #{tpu_custom_call.1} parent=27 // pred_check
          %p185 = pneg %p62
        $region30: #{tpu_custom_call.1} parent=27 // pred_check_branch
          %187 = sbr.rel (%p185) target = $region32
        $region31: #{tpu_custom_call.1} parent=27 // pred_region
          %188 = dma.done %s181, 128
        $region32: #{tpu_custom_call.1} parent=27 // pred_fallthru
          _
        // Predicated region
        $region33: #{tpu_custom_call.1} parent=27 // pred_check
          %p189 = pneg %p90
        $region34: #{tpu_custom_call.1} parent=27 // pred_check_branch
          %191 = sbr.rel (%p189) target = $region36
        $region35: #{tpu_custom_call.1} parent=27 // pred_region
          %192 = dma.done [#allocation6], 2048
        $region36: #{tpu_custom_call.1} parent=27 // pred_fallthru
          _
        %s193 = sand.u32 %s49, 1
        %s194 = scalar_lea.sflag [#allocation3], %s193
        %s195 = sand.u32 %s49, 1
        %s196 = smul.addr %s195, 8
        %s197 = scalar_lea.vmem [#allocation2], %s196
        %p198 = pneg %p62
        %p199 = pneg %p59
        %p200 = pneg %p90
        %p201 = pneg %p87
        %p202 = pneg %p118
        %p203 = pneg %p115
        %s204 = sand.u32 %s105, 1
        %s205 = scalar_lea.sflag [#allocation4], %s204
        %s206 = sand.u32 %s105, 1
        %s207 = smul.addr %s206, 8
        %s208 = scalar_lea.vmem [#allocation7], %s207
        %s209 = smul.u32 16, %s27
        %p210 = scmp.eq.s32.totalorder %s27, 0
        // Predicated region
        $region37: #{tpu_custom_call.1} parent=27 // pred_check
          %p211 = pneg %p210
        $region38: #{tpu_custom_call.1} parent=27 // pred_check_branch
          %213 = sbr.rel (%p211) target = $region40
        $region39: #{tpu_custom_call.1} parent=27 // pred_region
          %214 = vst [vmem:[%s208] sm:$0xff] 0.0
        $region40: #{tpu_custom_call.1} parent=27 // pred_fallthru
          _
        %v215 = vld [vmem:[%s208] sm:$0xff]
        %v216 = vld [vmem:[%s184] sm:$0xff]
        %v217 = vld [vmem:[#allocation5] sm:$0xff]
        %v218 = vld [vmem:[#allocation5 + $0x8] sm:$0xff]
        %v219 = vld [vmem:[#allocation5 + $0x10] sm:$0xff]
        %v220 = vld [vmem:[#allocation5 + $0x18] sm:$0xff]
        %v221 = vld [vmem:[#allocation5 + $0x20] sm:$0xff]
        %v222 = vld [vmem:[#allocation5 + $0x28] sm:$0xff]
        %v223 = vld [vmem:[#allocation5 + $0x30] sm:$0xff]
        %v224 = vld [vmem:[#allocation5 + $0x38] sm:$0xff]
        %v225 = vld [vmem:[#allocation5 + $0x40] sm:$0xff]
        %v226 = vld [vmem:[#allocation5 + $0x48] sm:$0xff]
        %v227 = vld [vmem:[#allocation5 + $0x50] sm:$0xff]
        %v228 = vld [vmem:[#allocation5 + $0x58] sm:$0xff]
        %v229 = vld [vmem:[#allocation5 + $0x60] sm:$0xff]
        %v230 = vld [vmem:[#allocation5 + $0x68] sm:$0xff]
        %v231 = vld [vmem:[#allocation5 + $0x70] sm:$0xff]
        %v232 = vld [vmem:[#allocation5 + $0x78] sm:$0xff]
        %233 = vmatprep.subr.mxu0 0.0
        %234 = vmatpush1.msra.mxu0 %v232
        %235 = vmatprep.subr.mxu0 0.0
        %236 = vmatpush1.msra.mxu0 %v231
        %237 = vmatprep.subr.mxu0 0.0
        %238 = vmatpush1.msra.mxu0 %v230
        %239 = vmatprep.subr.mxu0 0.0
        %240 = vmatpush1.msra.mxu0 %v229
        %241 = vmatprep.subr.mxu0 0.0
        %242 = vmatpush1.msra.mxu0 %v228
        %243 = vmatprep.subr.mxu0 0.0
        %244 = vmatpush1.msra.mxu0 %v227
        %245 = vmatprep.subr.mxu0 0.0
        %246 = vmatpush1.msra.mxu0 %v226
        %247 = vmatprep.subr.mxu0 0.0
        %248 = vmatpush1.msra.mxu0 %v225
        %249 = vmatprep.subr.mxu0 0.0
        %250 = vmatpush1.msra.mxu0 %v224
        %251 = vmatprep.subr.mxu0 0.0
        %252 = vmatpush1.msra.mxu0 %v223
        %253 = vmatprep.subr.mxu0 0.0
        %254 = vmatpush1.msra.mxu0 %v222
        %255 = vmatprep.subr.mxu0 0.0
        %256 = vmatpush1.msra.mxu0 %v221
        %257 = vmatprep.subr.mxu0 0.0
        %258 = vmatpush1.msra.mxu0 %v220
        %259 = vmatprep.subr.mxu0 0.0
        %260 = vmatpush1.msra.mxu0 %v219
        %261 = vmatprep.subr.mxu0 0.0
        %262 = vmatpush1.msra.mxu0 %v218
        %263 = vmatprep.subr.mxu0 0.0
        %264 = vmatpush1.msra.mxu0 %v217
        %265 = vmatprep.subr.mxu0 0.0
        %266 = vmatpush2.msra.mxu0 0.0
        %267 = vmatprep.subr.mxu0 0.0
        %268 = vmatpush2.msra.mxu0 0.0
        %269 = vmatprep.subr.mxu0 0.0
        %270 = vmatpush2.msra.mxu0 0.0
        %271 = vmatprep.subr.mxu0 0.0
        %272 = vmatpush2.msra.mxu0 0.0
        %273 = vmatprep.subr.mxu0 0.0
        %274 = vmatpush2.msra.mxu0 0.0
        %275 = vmatprep.subr.mxu0 0.0
        %276 = vmatpush2.msra.mxu0 0.0
        %277 = vmatprep.subr.mxu0 0.0
        %278 = vmatpush2.msra.mxu0 0.0
        %279 = vmatprep.subr.mxu0 0.0
        %280 = vmatpush2.msra.mxu0 0.0
        %281 = vmatprep.subr.mxu0 0.0
        %282 = vmatpush2.msra.mxu0 0.0
        %283 = vmatprep.subr.mxu0 0.0
        %284 = vmatpush2.msra.mxu0 0.0
        %285 = vmatprep.subr.mxu0 0.0
        %286 = vmatpush2.msra.mxu0 0.0
        %287 = vmatprep.subr.mxu0 0.0
        %288 = vmatpush2.msra.mxu0 0.0
        %289 = vmatprep.subr.mxu0 0.0
        %290 = vmatpush2.msra.mxu0 0.0
        %291 = vmatprep.subr.mxu0 0.0
        %292 = vmatpush2.msra.mxu0 0.0
        %293 = vmatprep.subr.mxu0 0.0
        %294 = vmatpush2.msra.mxu0 0.0
        %295 = vmatprep.subr.mxu0 0.0
        %296 = vmatpush2.msra.mxu0 0.0
        %297 = vmatprep.mubr.f32.mxu0 0.0
        %298 = vmatmul.mubr.f32.gmra.mxu0 %v216
        %v299 = vpop.f32.mrf.mxu0
        %v300 = vadd.f32 0.0, %v299
        %v301 = vpop.f32.mrf.mxu0
        %302 = vdwg.mxu0
        %v303 = vadd.f32 %v215, %v300
        %304 = vst [vmem:[%s208] sm:$0xff] %v303
        %s305 = sand.u32 %s105, 1
        %s306 = scalar_lea.sflag [#allocation4], %s305
        %s307 = sand.u32 %s105, 1
        %s308 = smul.addr %s307, 8
        %s309 = scalar_lea.vmem [#allocation7], %s308
        // Predicated region
        $region41: #{tpu_custom_call.1} parent=27 // pred_check
          %p310 = pneg %p115
        $region42: #{tpu_custom_call.1} parent=27 // pred_check_branch
          %312 = sbr.rel (%p310) target = $region44
        $region43: #{tpu_custom_call.1} parent=27 // pred_region
          %s314 = ssub.s32 128, 128
          %315 = vsyncadd %s306, %s314
          %s316 = sadd.s32 %s26, %s25
          %s317 = smul.addr %s316, 128
          %s318 = scalar_lea.hbm %s2, %s317
          %s320 = sshll.u32 %s309, 4
          %s321 = int_to_ptr.vmem [resolvable:$true] %s320
          %323 = dma.vmem_to_hbm [thread:$0]  %s321, 128, %s318, %s306
        $region44: #{tpu_custom_call.1} parent=27 // pred_fallthru
          _
      $region28: #{tpu_custom_call.1} parent=5 // pred_fallthru
        _
      %p324 = scmp.le.s32.totalorder 2, %s15
      // Predicated region
      $region45: #{tpu_custom_call.1} parent=5 // pred_check
        %p325 = pneg %p324
      $region46: #{tpu_custom_call.1} parent=5 // pred_check_branch
        %327 = sbr.rel (%p325) target = $region48
      $region47: #{tpu_custom_call.1} parent=5 // pred_region
        %s328 = ssub.s32 %s15, 2
        // Predicated region
        $region49: #{tpu_custom_call.1} parent=47 // pred_check
          %p329 = pneg %p121
        $region50: #{tpu_custom_call.1} parent=47 // pred_check_branch
          %331 = sbr.rel (%p329) target = $region52
        $region51: #{tpu_custom_call.1} parent=47 // pred_region
          %s332 = sand.u32 %s106, 1
          %s333 = scalar_lea.sflag [#allocation4], %s332
          %s334 = sand.u32 %s106, 1
          %s335 = smul.addr %s334, 8
          %s336 = scalar_lea.vmem [#allocation7], %s335
          %337 = dma.done %s333, 128
        $region52: #{tpu_custom_call.1} parent=47 // pred_fallthru
          _
      $region48: #{tpu_custom_call.1} parent=5 // pred_fallthru
        _
    $region6: #{tpu_custom_call.1} parent=1 // loop_footer
      %s19 = sadd.s32 1, %s15
    $region7: #{tpu_custom_call.1} parent=1 // loop_footer_branch
      %14 = sbr.rel target = $region3
    $region8: #{tpu_custom_call.1} parent=1 // loop_exit
      _
    %338 = vsyncpa [#allocation3], 1
    %s339 = scalar_lea.sflag [#allocation3], 1
    %340 = vsyncpa %s339, 1
    %341 = vsyncpa [#allocation6], 1
    %342 = vsyncpa [#allocation4], 1
    %s343 = scalar_lea.sflag [#allocation4], 1
    %344 = vsyncpa %s343, 1

</llo_original>
